<compile_context>
chip_gen: v7x
topology: tpu7x:2x2x1
jax: 0.10.0
libtpu: 0.0.40
codegen_flags: <defaults>
</compile_context>

<pallas_src>
import jax
import jax.numpy as jnp
from jax.experimental import pallas as pl
from jax.experimental.pallas import tpu as pltpu

MEAN = [123.675 / 255.0, 116.28 / 255.0, 103.53 / 255.0]
STD = [58.395 / 255.0, 57.12 / 255.0, 57.375 / 255.0]


def lambda_aug_kernel(a_pre_ref, b_pre_ref, a_post_ref, b_post_ref, x_ref, o_ref):
    # --- pre_tran (folded): un-normalize, scale to [0,255], round-half-up, clip ---
    t = x_ref[...] * a_pre_ref[...] + b_pre_ref[...]
    t = jnp.floor(t)
    t = jnp.clip(t, 0.0, 255.0)
    # The reference's .type(torch.uint8) is a no-op here: after floor + clip the values
    # lie exactly on the integer grid in [0, 255] (exact in f32), so no cast round-trip.

    # --- aug ---
    # TODO(synk): self.aug is an arbitrary user-supplied lambda_function; identity used.

    # --- after_tran (folded): Normalize(mean, std) on t/255 ---
    o_ref[...] = t * a_post_ref[...] + b_post_ref[...]


def _default_block_bytes():
    """Generation-aware per-tile byte budget (review: bigger tiles on faster HBM)."""
    try:
        kind = jax.devices()[0].device_kind.lower()
    except Exception:
        return 4 << 20
    if "v7" in kind or "7x" in kind:
        return 8 << 20          # 3.2 TB/s HBM: amortize ~0.35 us/step overhead
    if "v6" in kind:
        return 4 << 20
    return 3 << 20              # v5e and older (smaller default scoped VMEM)


def _fold_rows(R, L):
    """Free contiguous reshape factor f: (R, L) -> (R*f, L//f) so the sublane (row)
    dim becomes a multiple of 8, but only when lanes stay dense ((L//f) % 128 == 0)."""
    if R % 8 == 0:
        return 1
    for f in (2, 4, 8):
        if (R * f) % 8 == 0 and L % f == 0 and (L // f) % 128 == 0:
            return f
    return 1   # small sublane waste tolerated; padding rows would cost a full HBM copy


def _choose_col_tile(L, R, max_block_bytes, min_steps=4):
    """Lane-dense column tile: largest multiple of 128 under the byte budget.

    No divisor requirement — the grid uses pl.cdiv(L, cb) and Pallas masks the partial
    tail block.  Also capped so the grid has >= min_steps steps (pipeline stays busy
    and the parallel axis can shard across both v7x TensorCores)."""
    budget_cols = max(1, max_block_bytes // (R * 4))
    cb = max(128, (budget_cols // 128) * 128)
    cb = min(cb, pl.cdiv(L, 128) * 128)             # never exceed the 128-padded extent
    if L >= min_steps * 128:
        cb = min(cb, max(128, (L // min_steps) // 128 * 128))
    return cb


def lambda_aug_forward(x, boxes, *, max_block_bytes=None, donate_input=False):
    """x: (N, C=3, H, W) float32 (normalized image); boxes: passed through unchanged."""
    N, C, H, W = x.shape
    R, L = N * C, H * W
    if max_block_bytes is None:
        max_block_bytes = _default_block_bytes()

    # Opportunistic free reshape so the sublane (row) dim is a multiple of 8.
    f = _fold_rows(R, L)
    Rf, Lf = R * f, L // f

    # Per-row folded constants (row = channel, repeated over batch and fold factor).
    mean_rows = jnp.repeat(jnp.tile(jnp.asarray(MEAN, jnp.float32), N), f).reshape(Rf, 1)
    std_rows = jnp.repeat(jnp.tile(jnp.asarray(STD, jnp.float32), N), f).reshape(Rf, 1)
    a_pre = std_rows * 255.0
    b_pre = mean_rows * 255.0 + 0.5
    a_post = 1.0 / (255.0 * std_rows)
    b_post = -mean_rows / std_rows

    # Free view: contiguous NCHW -> (Rf, Lf); last dim is the lane-dense spatial axis.
    x2d = x.reshape(Rf, Lf)

    cb = _choose_col_tile(Lf, Rf, max_block_bytes)
    grid = (pl.cdiv(Lf, cb),)

    param_spec = pl.BlockSpec((Rf, 1), lambda j: (0, 0))   # tiny, resident every step
    img_spec = pl.BlockSpec((Rf, cb), lambda j: (0, j))

    out2d = pl.pallas_call(
        lambda_aug_kernel,
        out_shape=jax.ShapeDtypeStruct((Rf, Lf), jnp.float32),
        grid=grid,
        in_specs=[param_spec, param_spec, param_spec, param_spec, img_spec],
        out_specs=img_spec,
        input_output_aliases=({4: 0} if donate_input else {}),
        compiler_params=pltpu.CompilerParams(
            dimension_semantics=("parallel",),
            vmem_limit_bytes=40 << 20),
    )(a_pre, b_pre, a_post, b_post, x2d)

    return out2d.reshape(N, C, H, W), boxes


def _reference_forward(x, boxes):
    """Pure-JAX reference mirroring the PyTorch module exactly (original op order)."""
    mean = jnp.asarray(MEAN, dtype=jnp.float32)[None, :, None, None]
    std = jnp.asarray(STD, dtype=jnp.float32)[None, :, None, None]
    img = x * std + mean
    img = img * 255.0
    img = jnp.floor(img + 0.5)
    img = jnp.clip(img, 0.0, 255.0)
    img = img.astype(jnp.uint8).astype(jnp.float32)   # pre_tran quantization
    # aug == identity (see TODO above)
    out = (img / 255.0 - mean) / std                  # after_tran
    return out, boxes


def _assert_close_mod_quant(out, ref):
    """Outputs must match to float tolerance OR differ by exactly one uint8
    quantization level: the constant-folded pre-transform can flip floor() by ~1 ulp
    at exact integer boundaries (the same ambiguity exists between any two float
    implementations of the reference).  Such flips must also be rare."""
    diff = jnp.abs(out - ref)
    step = (1.0 / 255.0) / jnp.asarray(STD, jnp.float32)[None, :, None, None]
    exact = diff <= 1e-5
    one_level = jnp.abs(diff - step) <= 1e-4
    assert bool(jnp.all(exact | one_level)), "mismatch beyond one quantization level"
    assert float(jnp.mean((~exact).astype(jnp.float32))) < 0.01, "too many boundary flips"


if __name__ == "__main__":
    key = jax.random.PRNGKey(0)
    kx, kb, kx2 = jax.random.split(key, 3)
    # Small COCO-like batch: N=2, C=3 (RGB, mean/std have 3 entries), H=W=16.
    x = jax.random.normal(kx, (2, 3, 16, 16), dtype=jnp.float32)
    boxes = jax.random.uniform(kb, (2, 5, 4), dtype=jnp.float32) * 16.0

    ref, ref_boxes = _reference_forward(x, boxes)

    # Default tiling.
    out, out_boxes = lambda_aug_forward(x, boxes)
    out = jax.block_until_ready(out)
    out_boxes = jax.block_until_ready(out_boxes)
    assert out.shape == x.shape and out.dtype == jnp.float32
    _assert_close_mod_quant(out, ref)
    assert jnp.array_equal(out_boxes, ref_boxes), "boxes must pass through unchanged"

    # Force a multi-step grid (128-wide column tiles) to exercise the pipelined path.
    out2, _ = lambda_aug_forward(x, boxes, max_block_bytes=2 * 3 * 128 * 4)
    _assert_close_mod_quant(jax.block_until_ready(out2), ref)

    # Spatial size not a multiple of 128 -> cdiv grid with a masked partial tail block.
    x3 = jax.random.normal(kx2, (2, 3, 20, 20), dtype=jnp.float32)
    ref3, _ = _reference_forward(x3, boxes)
    out3, _ = lambda_aug_forward(x3, boxes, max_block_bytes=2 * 3 * 128 * 4)
    _assert_close_mod_quant(jax.block_until_ready(out3), ref3)

    print("KERNEL_OK")
</pallas_src>

<mosaic_0001>
module attributes {stable_mosaic.version = 11 : i64} {
  func.func @lambda_aug_kernel(%arg0: i32, %arg1: memref<6x1xf32, #tpu.memory_space<vmem>>, %arg2: memref<6x1xf32, #tpu.memory_space<vmem>>, %arg3: memref<6x1xf32, #tpu.memory_space<vmem>>, %arg4: memref<6x1xf32, #tpu.memory_space<vmem>>, %arg5: memref<6x256xf32, #tpu.memory_space<vmem>>, %arg6: memref<6x256xf32, #tpu.memory_space<vmem>>) attributes {dimension_semantics = [#tpu.dimension_semantics<parallel>], iteration_bounds = array<i64: 1>, scalar_prefetch = 0 : i64, scratch_operands = 0 : i64, tpu.core_type = #tpu.core_type<tc>, window_params = [{pipeline_mode = #tpu.pipeline_mode<synchronous>, transform_indices = @transform_0, window_bounds = array<i64: 6, 1>}, {pipeline_mode = #tpu.pipeline_mode<synchronous>, transform_indices = @transform_1, window_bounds = array<i64: 6, 1>}, {pipeline_mode = #tpu.pipeline_mode<synchronous>, transform_indices = @transform_2, window_bounds = array<i64: 6, 1>}, {pipeline_mode = #tpu.pipeline_mode<synchronous>, transform_indices = @transform_3, window_bounds = array<i64: 6, 1>}, {transform_indices = @transform_4, window_bounds = array<i64: 6, 256>}, {transform_indices = @transform_5, window_bounds = array<i64: 6, 256>}]} {
    %c0 = arith.constant 0 : index
    %c0_0 = arith.constant 0 : index
    %0 = vector.load %arg5[%c0, %c0_0] : memref<6x256xf32, #tpu.memory_space<vmem>>, vector<6x256xf32>
    %c0_1 = arith.constant 0 : index
    %c0_2 = arith.constant 0 : index
    %1 = vector.load %arg1[%c0_1, %c0_2] : memref<6x1xf32, #tpu.memory_space<vmem>>, vector<6x1xf32>
    %2 = vector.broadcast %1 : vector<6x1xf32> to vector<6x256xf32>
    %3 = arith.mulf %0, %2 : vector<6x256xf32>
    %c0_3 = arith.constant 0 : index
    %c0_4 = arith.constant 0 : index
    %4 = vector.load %arg2[%c0_3, %c0_4] : memref<6x1xf32, #tpu.memory_space<vmem>>, vector<6x1xf32>
    %5 = vector.broadcast %4 : vector<6x1xf32> to vector<6x256xf32>
    %6 = arith.addf %3, %5 : vector<6x256xf32>
    %7 = math.floor %6 : vector<6x256xf32>
    %cst = arith.constant 0.000000e+00 : f32
    %cst_5 = arith.constant 2.550000e+02 : f32
    %8 = vector.broadcast %cst : f32 to vector<6x256xf32>
    %9 = arith.maximumf %8, %7 : vector<6x256xf32>
    %10 = vector.broadcast %cst_5 : f32 to vector<6x256xf32>
    %11 = arith.minimumf %10, %9 : vector<6x256xf32>
    %c0_6 = arith.constant 0 : index
    %c0_7 = arith.constant 0 : index
    %12 = vector.load %arg3[%c0_6, %c0_7] : memref<6x1xf32, #tpu.memory_space<vmem>>, vector<6x1xf32>
    %13 = vector.broadcast %12 : vector<6x1xf32> to vector<6x256xf32>
    %14 = arith.mulf %11, %13 : vector<6x256xf32>
    %c0_8 = arith.constant 0 : index
    %c0_9 = arith.constant 0 : index
    %15 = vector.load %arg4[%c0_8, %c0_9] : memref<6x1xf32, #tpu.memory_space<vmem>>, vector<6x1xf32>
    %16 = vector.broadcast %15 : vector<6x1xf32> to vector<6x256xf32>
    %17 = arith.addf %14, %16 : vector<6x256xf32>
    %c0_10 = arith.constant 0 : index
    %c0_11 = arith.constant 0 : index
    %18 = vector.load %arg6[%c0_10, %c0_11] : memref<6x256xf32, #tpu.memory_space<vmem>>, vector<6x256xf32>
    tpu.vector_store %arg6[%c0_10, %c0_11], %17 {strides = array<i32>} : memref<6x256xf32, #tpu.memory_space<vmem>>, vector<6x256xf32>,
    return
  }
  func.func @transform_0(%arg0: i32) -> (i32, i32) {
    %c0_i32 = arith.constant 0 : i32
    %c0_i32_0 = arith.constant 0 : i32
    %c0_i32_1 = arith.constant 0 : i32
    return %c0_i32, %c0_i32_0 : i32, i32
  }
  func.func @transform_1(%arg0: i32) -> (i32, i32) {
    %c0_i32 = arith.constant 0 : i32
    %c0_i32_0 = arith.constant 0 : i32
    %c0_i32_1 = arith.constant 0 : i32
    return %c0_i32, %c0_i32_0 : i32, i32
  }
  func.func @transform_2(%arg0: i32) -> (i32, i32) {
    %c0_i32 = arith.constant 0 : i32
    %c0_i32_0 = arith.constant 0 : i32
    %c0_i32_1 = arith.constant 0 : i32
    return %c0_i32, %c0_i32_0 : i32, i32
  }
  func.func @transform_3(%arg0: i32) -> (i32, i32) {
    %c0_i32 = arith.constant 0 : i32
    %c0_i32_0 = arith.constant 0 : i32
    %c0_i32_1 = arith.constant 0 : i32
    return %c0_i32, %c0_i32_0 : i32, i32
  }
  func.func @transform_4(%arg0: i32) -> (i32, i32) {
    %c0_i32 = arith.constant 0 : i32
    %c0_i32_0 = arith.constant 0 : i32
    return %c0_i32, %arg0 : i32, i32
  }
  func.func @transform_5(%arg0: i32) -> (i32, i32) {
    %c0_i32 = arith.constant 0 : i32
    %c0_i32_0 = arith.constant 0 : i32
    return %c0_i32, %arg0 : i32, i32
  }
}

</mosaic_0001>

<llo_original>
// kernel: tpu_custom_call.1
$region0: #{tpu_custom_call.1}
  #allocation0 [shape = 'u32[]', space=smem, size = 0x4, offset = 0x4, fixed_abs, tag = 'smem constant byte address 0x4 - core index']
  #allocation1 [shape = 'u32[144,128]{1,0:T(1,128)}', space=vmem, size = 0x12000, scoped, tag = 'internal scratch']
  %s0 = inlined_call_operand.vmem [shape: f32[6,1], index: 0, kind: input, shape index: {}]
  %s1 = inlined_call_operand.vmem [shape: f32[6,1], index: 1, kind: input, shape index: {}]
  %s2 = inlined_call_operand.vmem [shape: f32[6,1], index: 2, kind: input, shape index: {}]
  %s3 = inlined_call_operand.vmem [shape: f32[6,1], index: 3, kind: input, shape index: {}]
  %s4 = inlined_call_operand.vmem [shape: f32[6,256], index: 4, kind: input, shape index: {}]
  %s5 = inlined_call_operand.hbm [shape: f32[6,256], index: 5, kind: output, shape index: {}]
  %s6 = sld [smem:[#allocation0]]
  $region30: #{tpu_custom_call.1} parent=0
    _
  %s8 = ssub.s32 1, %s6
  %s9 = scalar_select 0, %s8, %s6
  $region1: #{tpu_custom_call.1} parent=0
    #allocation2 [shape = 'u8[8192]{0}', space=vmem, size = 0x2000, scoped, tag = 'output window, operand 0, single buffered']
    #allocation3 [shape = 's32[1]{0}', space=sflag, size = 0x4, scoped, tag = 'scoped memory for tpu_custom_call.1']
    %10 = vsyncpa [#allocation3], 0
    // Predicated region
    $region2: #{tpu_custom_call.1} parent=1 // pred_check
      _
    $region3: #{tpu_custom_call.1} parent=1 // pred_check_branch
      %12 = sbr.rel (0) target = $region5
    $region4: #{tpu_custom_call.1} parent=1 // pred_region
      _
    $region5: #{tpu_custom_call.1} parent=1 // pred_fallthru
      _
    // Predicated region
    $region6: #{tpu_custom_call.1} parent=1 // pred_check
      _
    $region7: #{tpu_custom_call.1} parent=1 // pred_check_branch
      %14 = sbr.rel (0) target = $region9
    $region8: #{tpu_custom_call.1} parent=1 // pred_region
      _
    $region9: #{tpu_custom_call.1} parent=1 // pred_fallthru
      _
    // Predicated region
    $region10: #{tpu_custom_call.1} parent=1 // pred_check
      _
    $region11: #{tpu_custom_call.1} parent=1 // pred_check_branch
      %16 = sbr.rel (0) target = $region13
    $region12: #{tpu_custom_call.1} parent=1 // pred_region
      _
    $region13: #{tpu_custom_call.1} parent=1 // pred_fallthru
      _
    // Predicated region
    $region14: #{tpu_custom_call.1} parent=1 // pred_check
      _
    $region15: #{tpu_custom_call.1} parent=1 // pred_check_branch
      %18 = sbr.rel (0) target = $region17
    $region16: #{tpu_custom_call.1} parent=1 // pred_region
      _
    $region17: #{tpu_custom_call.1} parent=1 // pred_fallthru
      _
    // Predicated region
    $region18: #{tpu_custom_call.1} parent=1 // pred_check
      _
    $region19: #{tpu_custom_call.1} parent=1 // pred_check_branch
      %20 = sbr.rel (0) target = $region21
    $region20: #{tpu_custom_call.1} parent=1 // pred_region
      _
    $region21: #{tpu_custom_call.1} parent=1 // pred_fallthru
      _
    %v21 = vld [vmem:[%s4] sm:$0x3f]
    %v22 = vld [vmem:[%s4 + $0x8] sm:$0x3f]
    %v23 = vld [vmem:[%s0] sm:$0x3f]
    %25 = vset.pattern.permute.xlu0 0
    %26 = vperm.xlu0 %25, %v23
    %v27 = vpop.permute.xlu0 %26
    %v29 = vmul.f32 %v21, %v27
    %v30 = vmul.f32 %v22, %v27
    %v31 = vld [vmem:[%s1] sm:$0x3f]
    %33 = vset.pattern.permute.xlu0 0
    %34 = vperm.xlu0 %33, %v31
    %v35 = vpop.permute.xlu0 %34
    %v37 = vadd.f32 %v29, %v35
    %v38 = vadd.f32 %v30, %v35
    %v39 = vfloor.f32 %v37
    %v40 = vfloor.f32 %v38
    %v41 = vmax.f32 %v39, 0.0
    %v42 = vmax.f32 %v40, 0.0
    %v43 = vmin.f32 %v41, 255.0
    %v44 = vmin.f32 %v42, 255.0
    %v45 = vld [vmem:[%s2] sm:$0x3f]
    %47 = vset.pattern.permute.xlu0 0
    %48 = vperm.xlu0 %47, %v45
    %v49 = vpop.permute.xlu0 %48
    %v51 = vmul.f32 %v43, %v49
    %v52 = vmul.f32 %v44, %v49
    %v53 = vld [vmem:[%s3] sm:$0x3f]
    %55 = vset.pattern.permute.xlu0 0
    %56 = vperm.xlu0 %55, %v53
    %v57 = vpop.permute.xlu0 %56
    %v59 = vadd.f32 %v51, %v57
    %v60 = vadd.f32 %v52, %v57
    %61 = vst [vmem:[#allocation2] sm:$0x3f] %v59
    %62 = vst [vmem:[#allocation2 + $0x8] sm:$0x3f] %v60
    // Predicated region
    $region22: #{tpu_custom_call.1} parent=1 // pred_check
      _
    $region23: #{tpu_custom_call.1} parent=1 // pred_check_branch
      %64 = sbr.rel (0) target = $region25
    $region24: #{tpu_custom_call.1} parent=1 // pred_region
      %s66 = ssub.s32 256, 256
      %67 = vsyncadd [#allocation3], %s66
      %s69 = sshll.u32 [#allocation2], 4
      %s70 = int_to_ptr.vmem [resolvable:$true] %s69
      %72 = dma.vmem_to_hbm [thread:$0]  %s70, 256, %s5, [#allocation3]
    $region25: #{tpu_custom_call.1} parent=1 // pred_fallthru
      _
    // Predicated region
    $region26: #{tpu_custom_call.1} parent=1 // pred_check
      _
    $region27: #{tpu_custom_call.1} parent=1 // pred_check_branch
      %74 = sbr.rel (0) target = $region29
    $region28: #{tpu_custom_call.1} parent=1 // pred_region
      %75 = dma.done [#allocation3], 256
    $region29: #{tpu_custom_call.1} parent=1 // pred_fallthru
      _
    %76 = vsyncpa [#allocation3], 1

</llo_original>
